<compile_context>
chip_gen: v6e
topology: v6e:2x2x1
jax: 0.10.0
libtpu: 0.0.40
codegen_flags: <defaults>
</compile_context>

<pallas_src>
import functools

import jax
import jax.numpy as jnp
import numpy as np
from jax.experimental import pallas as pl
from jax.experimental.pallas import tpu as pltpu


def topdown_attention_kernel(att_ref, p_h_ref, w_att_ref, w_a_ref,
                             feat_out_ref, w_out_ref, *, l_valid):
    # att_ref:   (TB, Lp, H) compute dtype    p_h_ref: (TB, A) f32 (b_h + b_att folded in)
    # w_att_ref: (H, A) compute dtype         w_a_ref: (1, A)  f32
    # feat_out_ref: (TB, H) f32               w_out_ref: (TB, Lp) f32
    tb, L, H = att_ref.shape
    A = w_att_ref.shape[1]

    # p_att_features = att2att(att_features): one flattened MXU matmul.
    # L is padded to a multiple of 8 in the wrapper, so this reshape is
    # layout-free (no Mosaic relayout copy).
    att = att_ref[...]                                                 # (TB, L, H)
    p_att = jnp.dot(att.reshape(tb * L, H), w_att_ref[...],
                    preferred_element_type=jnp.float32).reshape(tb, L, A)

    # tanh(p_att + p_h); p_h was hoisted out of the grid and already contains
    # both b_h and b_att.
    z = jnp.tanh(p_att + p_h_ref[...][:, None, :])                     # (TB, L, A) f32

    # alpha_net: an (A, 1) matmul only fills 1 MXU lane; use a VPU multiply
    # plus an XLU lane reduce.  alpha_net's scalar bias is uniform over L and
    # a no-op under softmax, so it is dropped.
    logits = jnp.sum(z * w_a_ref[...], axis=-1)                        # (TB, L) f32

    # Mask padded locations before the softmax so they get zero weight.
    if l_valid < L:
        lane = jax.lax.broadcasted_iota(jnp.int32, (tb, L), 1)
        logits = jnp.where(lane < l_valid, logits, -1e30)

    # Softmax over the location (lane) axis.
    m = jnp.max(logits, axis=-1, keepdims=True)                        # (TB, 1)
    e = jnp.exp(logits - m)                                            # (TB, L)
    s = jnp.sum(e, axis=-1, keepdims=True)                             # (TB, 1)
    w = e * pl.reciprocal(s)                                           # exact: weights sum to 1
    w_out_ref[...] = w.astype(w_out_ref.dtype)

    # bmm(weights.unsqueeze(1), att_features): per batch element an M=1 MXU
    # matmul; do a broadcast multiply + sublane reduce instead, chunked over L
    # so no full (TB, L, H) f32 temporary is ever live in VMEM.
    CHUNK = 8
    weighted = jnp.zeros((tb, H), dtype=jnp.float32)
    for c in range(L // CHUNK):
        lo, hi = c * CHUNK, (c + 1) * CHUNK
        a = att_ref[:, lo:hi, :].astype(jnp.float32)                   # (TB, 8, H)
        wc = w[:, lo:hi]                                               # (TB, 8)
        weighted = weighted + jnp.sum(wc[:, :, None] * a, axis=1)
    feat_out_ref[...] = weighted.astype(feat_out_ref.dtype)


def _vmem_capacity_bytes():
    """Physical VMEM per TensorCore for the attached generation."""
    try:
        return int(pltpu.get_tpu_info().vmem_capacity_bytes)
    except Exception:
        return 64 * 1024 * 1024   # conservative fallback (v7x per-TC size)


def _plan(batch, L, H, A, itemsize):
    """Pick (tile_b, vmem_limit_bytes).

    tile_b is the largest batch tile that (a) fits a generation-derived VMEM
    budget *including in-kernel f32 intermediates*, and (b) still leaves the
    grid with ~8+ steps so the DMA pipeline stays busy and v7x's two
    TensorCores can split the batch axis.  tile_b is a multiple of 8 (or the
    full batch) to satisfy the sublane rule on the 2-D output blocks."""
    capacity = _vmem_capacity_bytes()
    budget = int(capacity * 0.4)

    resident = H * A * itemsize + A * 4 + 4096          # weights + small consts
    per_b = (2 * (L * H * itemsize                      # att block (double-buffered)
                  + A * 4                               # p_h block
                  + (H + L) * 4)                        # two output blocks
             + L * H * itemsize                         # att value for the flattened matmul
             + 3 * L * A * 4                            # p_att / z / tanh f32 intermediates
             + 4 * 8 * H * 4 + 8 * L)                   # chunked weighted-sum temps
    cap = max(1, (budget - resident) // per_b)

    MIN_STEPS = 8
    tile = min(cap, max(1, batch // MIN_STEPS))
    if tile < batch:
        tile = max(8, (tile // 8) * 8)                  # sublane-legal tile
    if tile >= batch:
        tile = batch                                    # tiny batch: single full-batch step

    need = resident + tile * per_b + (4 << 20)
    vmem_limit = int(min(max(need, 32 << 20), int(capacity * 0.6)))
    return tile, vmem_limit


def topdown_attention(att_features, h, params, *, compute_dtype=jnp.bfloat16):
    """att_features: (B, L, H), h: (B, H).

    params: w_att (H, A), b_att (A,), w_h (H, A), b_h (A,), w_a (A,), b_a ().
    Returns (weighted_att_features (B, H) f32, weights (B, L) f32)."""
    B, L, H = att_features.shape
    A = params["w_att"].shape[1]

    # Hoisted p_h = h2att(h): one batched matmul for the whole call.  b_att is
    # folded in here (tanh(att@W_att + b_att + h@W_h + b_h) is unchanged), so
    # neither b_att nor b_a ever enters VMEM.
    p_h = (jnp.dot(h.astype(jnp.float32), params["w_h"].astype(jnp.float32))
           + params["b_h"].astype(jnp.float32)
           + params["b_att"].astype(jnp.float32))                       # (B, A) f32

    # Pad L to a multiple of 8 so the in-kernel flatten is layout-free.
    L_pad = ((L + 7) // 8) * 8
    att = att_features.astype(compute_dtype)
    if L_pad != L:
        att = jnp.pad(att, ((0, 0), (0, L_pad - L), (0, 0)))

    w_att = params["w_att"].astype(compute_dtype)
    w_a = params["w_a"].reshape(1, A).astype(jnp.float32)

    itemsize = jnp.dtype(compute_dtype).itemsize
    tile_b, vmem_limit = _plan(B, L_pad, H, A, itemsize)

    # Pad the batch so tile_b divides it (padded rows are sliced off below).
    b_pad = ((B + tile_b - 1) // tile_b) * tile_b
    if b_pad != B:
        att = jnp.pad(att, ((0, b_pad - B), (0, 0), (0, 0)))
        p_h = jnp.pad(p_h, ((0, b_pad - B), (0, 0)))
    grid = (b_pad // tile_b,)

    cost = pl.CostEstimate(
        flops=2 * b_pad * L_pad * H * A + 6 * b_pad * L_pad * A
              + 3 * b_pad * L_pad * H + 6 * b_pad * L_pad,
        transcendentals=b_pad * L_pad * (A + 1),
        bytes_accessed=(b_pad * L_pad * H * itemsize + b_pad * A * 4
                        + H * A * itemsize + A * 4
                        + b_pad * (H + L_pad) * 4))

    kernel = functools.partial(topdown_attention_kernel, l_valid=L)

    feat, weights = pl.pallas_call(
        kernel,
        out_shape=(jax.ShapeDtypeStruct((b_pad, H), jnp.float32),
                   jax.ShapeDtypeStruct((b_pad, L_pad), jnp.float32)),
        grid_spec=pltpu.PrefetchScalarGridSpec(
            num_scalar_prefetch=0,
            grid=grid,
            in_specs=[
                pl.BlockSpec((tile_b, L_pad, H), lambda b: (b, 0, 0)),   # att_features
                pl.BlockSpec((tile_b, A), lambda b: (b, 0)),             # hoisted p_h (+biases)
                pl.BlockSpec((H, A), lambda b: (0, 0)),                  # att2att weight
                pl.BlockSpec((1, A), lambda b: (0, 0)),                  # alpha_net weight
            ],
            out_specs=[
                pl.BlockSpec((tile_b, H), lambda b: (b, 0)),             # weighted features
                pl.BlockSpec((tile_b, L_pad), lambda b: (b, 0)),         # attention weights
            ],
        ),
        compiler_params=pltpu.CompilerParams(
            dimension_semantics=("parallel",),       # v7x: 2 TCs split the batch axis
            vmem_limit_bytes=vmem_limit),
        cost_estimate=cost,
    )(att, p_h, w_att, w_a)

    return feat[:B], weights[:B, :L]


def topdown_attention_ref(att_features, h, params):
    """Pure-JAX reference mirroring the PyTorch forward (including both biases)."""
    p_att = att_features @ params["w_att"] + params["b_att"]                    # (B, L, A)
    p_h = h @ params["w_h"] + params["b_h"]                                     # (B, A)
    logits = jnp.tanh(p_att + p_h[:, None, :]) @ params["w_a"] + params["b_a"]  # (B, L)
    weights = jax.nn.softmax(logits, axis=1)                                    # (B, L)
    weighted = jnp.einsum("bl,blh->bh", weights, att_features)                  # (B, H)
    return weighted, weights


if __name__ == "__main__":
    master_key = jax.random.PRNGKey(0)

    def run_case(case_key, B, L, H, A):
        k1, k2, k3, k4, k5, k6, k7, k8 = jax.random.split(case_key, 8)
        att_features = jax.random.normal(k1, (B, L, H), dtype=jnp.float32)
        h = jax.random.normal(k2, (B, H), dtype=jnp.float32)
        params = {
            "w_att": 0.1 * jax.random.normal(k3, (H, A), dtype=jnp.float32),
            "b_att": 0.1 * jax.random.normal(k4, (A,), dtype=jnp.float32),
            "w_h":   0.1 * jax.random.normal(k5, (H, A), dtype=jnp.float32),
            "b_h":   0.1 * jax.random.normal(k6, (A,), dtype=jnp.float32),
            "w_a":   0.1 * jax.random.normal(k7, (A,), dtype=jnp.float32),
            "b_a":   0.1 * jax.random.normal(k8, (), dtype=jnp.float32),
        }

        ref_feat, ref_w = topdown_attention_ref(att_features, h, params)

        # f32 feature path: tight tolerance.
        feat, w = topdown_attention(att_features, h, params,
                                    compute_dtype=jnp.float32)
        feat = jax.block_until_ready(feat)
        w = jax.block_until_ready(w)
        assert feat.shape == (B, H) and w.shape == (B, L)
        np.testing.assert_allclose(np.asarray(feat), np.asarray(ref_feat),
                                   rtol=5e-3, atol=5e-3)
        np.testing.assert_allclose(np.asarray(w), np.asarray(ref_w),
                                   rtol=5e-3, atol=5e-3)

        # Default bf16 feature path (f32 accumulation): looser tolerance.
        feat_bf, w_bf = topdown_attention(att_features, h, params)
        feat_bf = jax.block_until_ready(feat_bf)
        w_bf = jax.block_until_ready(w_bf)
        np.testing.assert_allclose(np.asarray(feat_bf), np.asarray(ref_feat),
                                   rtol=1e-1, atol=1e-1)
        np.testing.assert_allclose(np.asarray(w_bf), np.asarray(ref_w),
                                   rtol=1e-1, atol=1e-1)

    # Canonical small case: batch=2, locations=16 (4x4 spatial), hidden=32, att_hidden=32.
    run_case(jax.random.fold_in(master_key, 0), B=2, L=16, H=32, A=32)
    # Case exercising L padding + softmax masking, batch padding and a multi-step grid.
    run_case(jax.random.fold_in(master_key, 1), B=21, L=12, H=64, A=48)

    print("KERNEL_OK")
</pallas_src>

<mosaic_0001>
module attributes {stable_mosaic.version = 11 : i64} {
  func.func @topdown_attention_kernel(%arg0: i32, %arg1: memref<2x16x32xf32, #tpu.memory_space<vmem>>, %arg2: memref<2x32xf32, #tpu.memory_space<vmem>>, %arg3: memref<32x32xf32, #tpu.memory_space<vmem>>, %arg4: memref<1x32xf32, #tpu.memory_space<vmem>>, %arg5: memref<2x32xf32, #tpu.memory_space<vmem>>, %arg6: memref<2x16xf32, #tpu.memory_space<vmem>>) attributes {dimension_semantics = [#tpu.dimension_semantics<parallel>], iteration_bounds = array<i64: 1>, scalar_prefetch = 0 : i64, scratch_operands = 0 : i64, tpu.core_type = #tpu.core_type<tc>, window_params = [{transform_indices = @transform_0, window_bounds = array<i64: 2, 16, 32>}, {transform_indices = @transform_1, window_bounds = array<i64: 2, 32>}, {pipeline_mode = #tpu.pipeline_mode<synchronous>, transform_indices = @transform_2, window_bounds = array<i64: 32, 32>}, {pipeline_mode = #tpu.pipeline_mode<synchronous>, transform_indices = @transform_3, window_bounds = array<i64: 1, 32>}, {transform_indices = @transform_4, window_bounds = array<i64: 2, 32>}, {transform_indices = @transform_5, window_bounds = array<i64: 2, 16>}]} {
    %c0 = arith.constant 0 : index
    %c0_0 = arith.constant 0 : index
    %c0_1 = arith.constant 0 : index
    %0 = vector.load %arg1[%c0, %c0_0, %c0_1] : memref<2x16x32xf32, #tpu.memory_space<vmem>>, vector<2x16x32xf32>
    %1 = vector.shape_cast %0 : vector<2x16x32xf32> to vector<32x32xf32>
    %c0_2 = arith.constant 0 : index
    %c0_3 = arith.constant 0 : index
    %2 = vector.load %arg3[%c0_2, %c0_3] : memref<32x32xf32, #tpu.memory_space<vmem>>, vector<32x32xf32>
    %cst = arith.constant dense<0.000000e+00> : vector<32x32xf32>
    %3 = tpu.matmul %1, %2, %cst {dimension_numbers = #tpu.dot_dimension_numbers<[1], [0], [0], [1], [0, 0, 1, 1], [], []>} : vector<32x32xf32>, vector<32x32xf32>, vector<32x32xf32> -> vector<32x32xf32>
    %4 = vector.shape_cast %3 : vector<32x32xf32> to vector<2x16x32xf32>
    %c0_4 = arith.constant 0 : index
    %c0_5 = arith.constant 0 : index
    %5 = vector.load %arg2[%c0_4, %c0_5] : memref<2x32xf32, #tpu.memory_space<vmem>>, vector<2x32xf32>
    %6 = vector.shape_cast %5 : vector<2x32xf32> to vector<2x1x32xf32>
    %7 = vector.broadcast %6 : vector<2x1x32xf32> to vector<2x16x32xf32>
    %8 = arith.addf %4, %7 : vector<2x16x32xf32>
    %9 = math.tanh %8 : vector<2x16x32xf32>
    %c0_6 = arith.constant 0 : index
    %c0_7 = arith.constant 0 : index
    %10 = vector.load %arg4[%c0_6, %c0_7] : memref<1x32xf32, #tpu.memory_space<vmem>>, vector<1x32xf32>
    %11 = vector.shape_cast %10 : vector<1x32xf32> to vector<1x1x32xf32>
    %12 = vector.broadcast %11 : vector<1x1x32xf32> to vector<2x16x32xf32>
    %13 = arith.mulf %9, %12 : vector<2x16x32xf32>
    %cst_8 = arith.constant dense<0.000000e+00> : vector<2x16xf32>
    %14 = vector.multi_reduction <add>, %13, %cst_8 [2] : vector<2x16x32xf32> to vector<2x16xf32>
    %cst_9 = arith.constant dense<0xFF800000> : vector<2xf32>
    %15 = vector.multi_reduction <maximumf>, %14, %cst_9 [1] : vector<2x16xf32> to vector<2xf32>
    %16 = vector.shape_cast %15 : vector<2xf32> to vector<2x1xf32>
    %17 = vector.broadcast %16 : vector<2x1xf32> to vector<2x16xf32>
    %18 = arith.subf %14, %17 : vector<2x16xf32>
    %19 = math.exp %18 : vector<2x16xf32>
    %cst_10 = arith.constant dense<0.000000e+00> : vector<2xf32>
    %20 = vector.multi_reduction <add>, %19, %cst_10 [1] : vector<2x16xf32> to vector<2xf32>
    %21 = vector.shape_cast %20 : vector<2xf32> to vector<2x1xf32>
    %22 = tpu.reciprocal %21 : vector<2x1xf32> -> vector<2x1xf32>
    %23 = vector.broadcast %22 : vector<2x1xf32> to vector<2x16xf32>
    %24 = arith.mulf %19, %23 : vector<2x16xf32>
    %c0_11 = arith.constant 0 : index
    %c0_12 = arith.constant 0 : index
    %25 = vector.load %arg6[%c0_11, %c0_12] : memref<2x16xf32, #tpu.memory_space<vmem>>, vector<2x16xf32>
    tpu.vector_store %arg6[%c0_11, %c0_12], %24 {strides = array<i32>} : memref<2x16xf32, #tpu.memory_space<vmem>>, vector<2x16xf32>,
    %cst_13 = arith.constant 0.000000e+00 : f32
    %26 = vector.broadcast %cst_13 : f32 to vector<2x32xf32>
    %c0_14 = arith.constant 0 : index
    %c0_15 = arith.constant 0 : index
    %c0_16 = arith.constant 0 : index
    %27 = vector.load %arg1[%c0_14, %c0_15, %c0_16] : memref<2x16x32xf32, #tpu.memory_space<vmem>>, vector<2x8x32xf32>
    %28 = vector.extract_strided_slice %24 {offsets = [0, 0], sizes = [2, 8], strides = [1, 1]} : vector<2x16xf32> to vector<2x8xf32>
    %29 = vector.shape_cast %28 : vector<2x8xf32> to vector<2x8x1xf32>
    %30 = vector.broadcast %29 : vector<2x8x1xf32> to vector<2x8x32xf32>
    %31 = arith.mulf %30, %27 : vector<2x8x32xf32>
    %cst_17 = arith.constant dense<0.000000e+00> : vector<2x32xf32>
    %32 = vector.multi_reduction <add>, %31, %cst_17 [1] : vector<2x8x32xf32> to vector<2x32xf32>
    %33 = arith.addf %26, %32 : vector<2x32xf32>
    %c0_18 = arith.constant 0 : index
    %c8 = arith.constant 8 : index
    %c0_19 = arith.constant 0 : index
    %34 = vector.load %arg1[%c0_18, %c8, %c0_19] : memref<2x16x32xf32, #tpu.memory_space<vmem>>, vector<2x8x32xf32>
    %35 = vector.extract_strided_slice %24 {offsets = [0, 8], sizes = [2, 8], strides = [1, 1]} : vector<2x16xf32> to vector<2x8xf32>
    %36 = vector.shape_cast %35 : vector<2x8xf32> to vector<2x8x1xf32>
    %37 = vector.broadcast %36 : vector<2x8x1xf32> to vector<2x8x32xf32>
    %38 = arith.mulf %37, %34 : vector<2x8x32xf32>
    %cst_20 = arith.constant dense<0.000000e+00> : vector<2x32xf32>
    %39 = vector.multi_reduction <add>, %38, %cst_20 [1] : vector<2x8x32xf32> to vector<2x32xf32>
    %40 = arith.addf %33, %39 : vector<2x32xf32>
    %c0_21 = arith.constant 0 : index
    %c0_22 = arith.constant 0 : index
    %41 = vector.load %arg5[%c0_21, %c0_22] : memref<2x32xf32, #tpu.memory_space<vmem>>, vector<2x32xf32>
    tpu.vector_store %arg5[%c0_21, %c0_22], %40 {strides = array<i32>} : memref<2x32xf32, #tpu.memory_space<vmem>>, vector<2x32xf32>,
    return
  }
  func.func @transform_0(%arg0: i32) -> (i32, i32, i32) {
    %c0_i32 = arith.constant 0 : i32
    %c0_i32_0 = arith.constant 0 : i32
    %c0_i32_1 = arith.constant 0 : i32
    return %arg0, %c0_i32, %c0_i32_0 : i32, i32, i32
  }
  func.func @transform_1(%arg0: i32) -> (i32, i32) {
    %c0_i32 = arith.constant 0 : i32
    %c0_i32_0 = arith.constant 0 : i32
    return %arg0, %c0_i32 : i32, i32
  }
  func.func @transform_2(%arg0: i32) -> (i32, i32) {
    %c0_i32 = arith.constant 0 : i32
    %c0_i32_0 = arith.constant 0 : i32
    %c0_i32_1 = arith.constant 0 : i32
    return %c0_i32, %c0_i32_0 : i32, i32
  }
  func.func @transform_3(%arg0: i32) -> (i32, i32) {
    %c0_i32 = arith.constant 0 : i32
    %c0_i32_0 = arith.constant 0 : i32
    %c0_i32_1 = arith.constant 0 : i32
    return %c0_i32, %c0_i32_0 : i32, i32
  }
  func.func @transform_4(%arg0: i32) -> (i32, i32) {
    %c0_i32 = arith.constant 0 : i32
    %c0_i32_0 = arith.constant 0 : i32
    return %arg0, %c0_i32 : i32, i32
  }
  func.func @transform_5(%arg0: i32) -> (i32, i32) {
    %c0_i32 = arith.constant 0 : i32
    %c0_i32_0 = arith.constant 0 : i32
    return %arg0, %c0_i32 : i32, i32
  }
}

</mosaic_0001>

<llo_original>
// kernel: tpu_custom_call.1
$region0: #{tpu_custom_call.1}
  #allocation0 [shape = 'u32[]', space=smem, size = 0x4, offset = 0x4, fixed_abs, tag = 'smem constant byte address 0x4 - core index']
  #allocation1 [shape = 'u32[144,128]{1,0:T(1,128)}', space=vmem, size = 0x12000, scoped, tag = 'internal scratch']
  %s0 = inlined_call_operand.hbm [shape: f32[2,16,32], index: 0, kind: input, shape index: {}]
  %s1 = inlined_call_operand.hbm [shape: f32[2,32], index: 1, kind: input, shape index: {}]
  %s2 = inlined_call_operand.hbm [shape: f32[32,32], index: 2, kind: input, shape index: {}]
  %s3 = inlined_call_operand.vmem [shape: f32[1,32], index: 3, kind: input, shape index: {}]
  %s4 = inlined_call_operand.hbm [shape: f32[2,32], index: 4, kind: output, shape index: {0}]
  %s5 = inlined_call_operand.hbm [shape: f32[2,16], index: 5, kind: output, shape index: {1}]
  %6 = xla_tuple %s4, %s5
  %s7 = sld [smem:[#allocation0]]
  $region46: #{tpu_custom_call.1} parent=0
    _
  %s9 = ssub.s32 1, %s7
  %s10 = scalar_select 0, %s9, %s7
  $region1: #{tpu_custom_call.1} parent=0
    #allocation2 [shape = 'u8[16384]{0}', space=vmem, size = 0x4000, scoped, tag = 'input window, operand 0, single buffered']
    #allocation3 [shape = 's32[1]{0}', space=sflag, size = 0x4, scoped, tag = 'scoped memory for tpu_custom_call.1']
    #allocation4 [shape = 's32[1]{0}', space=sflag, size = 0x4, scoped, tag = 'scoped memory for tpu_custom_call.1']
    #allocation5 [shape = 'u8[1024]{0}', space=vmem, size = 0x400, scoped, tag = 'input window, operand 1, single buffered']
    #allocation6 [shape = 's32[1]{0}', space=sflag, size = 0x4, scoped, tag = 'scoped memory for tpu_custom_call.1']
    #allocation7 [shape = 'u8[16384]{0}', space=vmem, size = 0x4000, scoped, tag = 'input window, operand 2, single buffered']
    #allocation8 [shape = 'u8[1024]{0}', space=vmem, size = 0x400, scoped, tag = 'output window, operand 0, single buffered']
    #allocation9 [shape = 'u8[1024]{0}', space=vmem, size = 0x400, scoped, tag = 'output window, operand 1, single buffered']
    #allocation10 [shape = 's32[1]{0}', space=sflag, size = 0x4, scoped, tag = 'scoped memory for tpu_custom_call.1']
    %11 = vsyncpa [#allocation3], 0
    %12 = vsyncpa [#allocation6], 0
    %13 = vsyncpa [#allocation4], 0
    %14 = vsyncpa [#allocation10], 0
    // Predicated region
    $region2: #{tpu_custom_call.1} parent=1 // pred_check
      _
    $region3: #{tpu_custom_call.1} parent=1 // pred_check_branch
      %16 = sbr.rel (0) target = $region5
    $region4: #{tpu_custom_call.1} parent=1 // pred_region
      %s18 = ssub.s32 512, 512
      %19 = vsyncadd [#allocation3], %s18
      %s20 = sshll.u32 [#allocation2], 4
      %s21 = int_to_ptr.vmem [resolvable:$true] %s20
      %26 = dma.hbm_to_vmem [thread:$0]  %s0, 512, %s21, [#allocation3], 128, 128, 8
    $region5: #{tpu_custom_call.1} parent=1 // pred_fallthru
      _
    // Predicated region
    $region6: #{tpu_custom_call.1} parent=1 // pred_check
      _
    $region7: #{tpu_custom_call.1} parent=1 // pred_check_branch
      %28 = sbr.rel (0) target = $region9
    $region8: #{tpu_custom_call.1} parent=1 // pred_region
      %s30 = ssub.s32 32, 32
      %31 = vsyncadd [#allocation6], %s30
      %s33 = sshll.u32 [#allocation5], 4
      %s34 = int_to_ptr.vmem [resolvable:$true] %s33
      %36 = dma.hbm_to_vmem [thread:$0]  %s1, 32, %s34, [#allocation6]
    $region9: #{tpu_custom_call.1} parent=1 // pred_fallthru
      _
    // Predicated region
    $region10: #{tpu_custom_call.1} parent=1 // pred_check
      _
    $region11: #{tpu_custom_call.1} parent=1 // pred_check_branch
      %38 = sbr.rel (0) target = $region13
    $region12: #{tpu_custom_call.1} parent=1 // pred_region
      %s40 = ssub.s32 512, 512
      %41 = vsyncadd [#allocation6], %s40
      %s42 = sshll.u32 [#allocation7], 4
      %s43 = int_to_ptr.vmem [resolvable:$true] %s42
      %48 = dma.hbm_to_vmem [thread:$0]  %s2, 512, %s43, [#allocation6], 128, 128, 8
    $region13: #{tpu_custom_call.1} parent=1 // pred_fallthru
      _
    // Predicated region
    $region14: #{tpu_custom_call.1} parent=1 // pred_check
      _
    $region15: #{tpu_custom_call.1} parent=1 // pred_check_branch
      %50 = sbr.rel (0) target = $region17
    $region16: #{tpu_custom_call.1} parent=1 // pred_region
      _
    $region17: #{tpu_custom_call.1} parent=1 // pred_fallthru
      _
    // Predicated region
    $region18: #{tpu_custom_call.1} parent=1 // pred_check
      _
    $region19: #{tpu_custom_call.1} parent=1 // pred_check_branch
      %52 = sbr.rel (0) target = $region21
    $region20: #{tpu_custom_call.1} parent=1 // pred_region
      %53 = dma.done [#allocation3], 512
    $region21: #{tpu_custom_call.1} parent=1 // pred_fallthru
      _
    // Predicated region
    $region22: #{tpu_custom_call.1} parent=1 // pred_check
      _
    $region23: #{tpu_custom_call.1} parent=1 // pred_check_branch
      %55 = sbr.rel (0) target = $region25
    $region24: #{tpu_custom_call.1} parent=1 // pred_region
      %56 = dma.done [#allocation6], 32
    $region25: #{tpu_custom_call.1} parent=1 // pred_fallthru
      _
    // Predicated region
    $region26: #{tpu_custom_call.1} parent=1 // pred_check
      _
    $region27: #{tpu_custom_call.1} parent=1 // pred_check_branch
      %58 = sbr.rel (0) target = $region29
    $region28: #{tpu_custom_call.1} parent=1 // pred_region
      %59 = dma.done [#allocation6], 512
    $region29: #{tpu_custom_call.1} parent=1 // pred_fallthru
      _
    %v60 = vld [vmem:[#allocation2] sm:$0xff]
    %v61 = vld [vmem:[#allocation2 + $0x8] sm:$0xff]
    %v62 = vld [vmem:[#allocation2 + $0x10] sm:$0xff]
    %v63 = vld [vmem:[#allocation2 + $0x18] sm:$0xff]
    %v64 = vld [vmem:[#allocation7] sm:$0xff]
    %v65 = vld [vmem:[#allocation7 + $0x8] sm:$0xff]
    %v66 = vld [vmem:[#allocation7 + $0x10] sm:$0xff]
    %v67 = vld [vmem:[#allocation7 + $0x18] sm:$0xff]
    %vm68 = vcmask 261120
    %v70 = vsel %vm68, %v60, 0
    %v73 = vsel %vm68, %v61, 0
    %v76 = vsel %vm68, %v62, 0
    %v79 = vsel %vm68, %v63, 0
    %81 = vmatprep.subr.mxu0 0.0
    %82 = vmatpush1.msra.mxu0 0.0
    %83 = vmatprep.subr.mxu0 0.0
    %84 = vmatpush1.msra.mxu0 0.0
    %85 = vmatprep.subr.mxu0 0.0
    %86 = vmatpush1.msra.mxu0 0.0
    %87 = vmatprep.subr.mxu0 0.0
    %88 = vmatpush1.msra.mxu0 0.0
    %89 = vmatprep.subr.mxu0 0.0
    %90 = vmatpush1.msra.mxu0 0.0
    %91 = vmatprep.subr.mxu0 0.0
    %92 = vmatpush1.msra.mxu0 0.0
    %93 = vmatprep.subr.mxu0 0.0
    %94 = vmatpush1.msra.mxu0 0.0
    %95 = vmatprep.subr.mxu0 0.0
    %96 = vmatpush1.msra.mxu0 0.0
    %97 = vmatprep.subr.mxu0 0.0
    %98 = vmatpush1.msra.mxu0 0.0
    %99 = vmatprep.subr.mxu0 0.0
    %100 = vmatpush1.msra.mxu0 0.0
    %101 = vmatprep.subr.mxu0 0.0
    %102 = vmatpush1.msra.mxu0 0.0
    %103 = vmatprep.subr.mxu0 0.0
    %104 = vmatpush1.msra.mxu0 0.0
    %105 = vmatprep.subr.mxu0 0.0
    %106 = vmatpush1.msra.mxu0 %v67
    %107 = vmatprep.subr.mxu0 0.0
    %108 = vmatpush1.msra.mxu0 %v66
    %109 = vmatprep.subr.mxu0 0.0
    %110 = vmatpush1.msra.mxu0 %v65
    %111 = vmatprep.subr.mxu0 0.0
    %112 = vmatpush1.msra.mxu0 %v64
    %113 = vmatprep.subr.mxu0 0.0
    %114 = vmatpush2.msra.mxu0 0.0
    %115 = vmatprep.subr.mxu0 0.0
    %116 = vmatpush2.msra.mxu0 0.0
    %117 = vmatprep.subr.mxu0 0.0
    %118 = vmatpush2.msra.mxu0 0.0
    %119 = vmatprep.subr.mxu0 0.0
    %120 = vmatpush2.msra.mxu0 0.0
    %121 = vmatprep.subr.mxu0 0.0
    %122 = vmatpush2.msra.mxu0 0.0
    %123 = vmatprep.subr.mxu0 0.0
    %124 = vmatpush2.msra.mxu0 0.0
    %125 = vmatprep.subr.mxu0 0.0
    %126 = vmatpush2.msra.mxu0 0.0
    %127 = vmatprep.subr.mxu0 0.0
    %128 = vmatpush2.msra.mxu0 0.0
    %129 = vmatprep.subr.mxu0 0.0
    %130 = vmatpush2.msra.mxu0 0.0
    %131 = vmatprep.subr.mxu0 0.0
    %132 = vmatpush2.msra.mxu0 0.0
    %133 = vmatprep.subr.mxu0 0.0
    %134 = vmatpush2.msra.mxu0 0.0
    %135 = vmatprep.subr.mxu0 0.0
    %136 = vmatpush2.msra.mxu0 0.0
    %137 = vmatprep.subr.mxu0 0.0
    %138 = vmatpush2.msra.mxu0 0.0
    %139 = vmatprep.subr.mxu0 0.0
    %140 = vmatpush2.msra.mxu0 0.0
    %141 = vmatprep.subr.mxu0 0.0
    %142 = vmatpush2.msra.mxu0 0.0
    %143 = vmatprep.subr.mxu0 0.0
    %144 = vmatpush2.msra.mxu0 0.0
    %145 = vmatprep.mubr.f32.mxu0 0.0
    %146 = vmatmul.mubr.f32.gmra.mxu0 %v70
    %v147 = vpop.f32.mrf.mxu0
    %v148 = vadd.f32 0.0, %v147
    %v149 = vpop.f32.mrf.mxu0
    %150 = vmatprep.mubr.f32.mxu0 0.0
    %151 = vmatmul.mubr.f32.gmra.mxu0 %v73
    %v152 = vpop.f32.mrf.mxu0
    %v153 = vadd.f32 0.0, %v152
    %v154 = vpop.f32.mrf.mxu0
    %155 = vmatprep.mubr.f32.mxu0 0.0
    %156 = vmatmul.mubr.f32.gmra.mxu0 %v76
    %v157 = vpop.f32.mrf.mxu0
    %v158 = vadd.f32 0.0, %v157
    %v159 = vpop.f32.mrf.mxu0
    %160 = vmatprep.mubr.f32.mxu0 0.0
    %161 = vmatmul.mubr.f32.gmra.mxu0 %v79
    %v162 = vpop.f32.mrf.mxu0
    %v163 = vadd.f32 0.0, %v162
    %v164 = vpop.f32.mrf.mxu0
    %165 = vdwg.mxu0
    %v166 = vld [vmem:[#allocation5] sm:$0x3]
    %v169 = vunpack.c.l.s4 1966171168
    %v170 = vunpack.c.0.s8 %v169
    %v171 = vlaneseq
    %v172 = vshrl.u32 %v171, 7
    %v173 = vsub.s32 %v170, %v172
    %v174 = vrot.slane %v166, %v173
    %v175 = vcombine.high %v174, %v174
    %v177 = vunpack.c.l.s4 1966171168
    %v178 = vunpack.c.0.s8 %v177
    %v179 = vlaneseq
    %v180 = vshrl.u32 %v179, 7
    %v181 = vsub.s32 %v178, %v180
    %v182 = vrot.slane %v174, %v181
    %v184 = vunpack.c.l.s4 1966171168
    %v185 = vunpack.c.0.s8 %v184
    %v186 = vlaneseq
    %v187 = vshrl.u32 %v186, 7
    %v188 = vsub.s32 %v185, %v187
    %v189 = vrot.slane %v175, %v188
    %v190 = vlaneseq
    %v191 = vshrl.u32 %v190, 7
    %v192 = vsub.s32 0, %v191
    %v193 = vrot.slane %v182, %v192
    %v194 = vlaneseq
    %v195 = vshrl.u32 %v194, 7
    %v196 = vsub.s32 0, %v195
    %v197 = vrot.slane %v189, %v196
    %v200 = vadd.f32 %v148, %v193
    %v201 = vadd.f32 %v153, %v193
    %v202 = vadd.f32 %v158, %v197
    %v203 = vadd.f32 %v163, %v197
    %v204 = vtanh.pop %v200
    %v205 = vtanh.pop %v201
    %v206 = vtanh.pop %v202
    %v207 = vtanh.pop %v203
    %v208 = vld [vmem:[%s3] sm:$0x1]
    %v210 = vlaneseq
    %v211 = vshrl.u32 %v210, 7
    %v212 = vsub.s32 0, %v211
    %v213 = vrot.slane %v208, %v212
    %v215 = vmul.f32 %v204, %v213
    %v216 = vmul.f32 %v205, %v213
    %v217 = vmul.f32 %v206, %v213
    %v218 = vmul.f32 %v207, %v213
    %v219 = vsel %vm68, %v215, 0.0
    %220 = vadd.xlane.f32.xlu0 %v219
    %v221 = vpop.xlane.xlu0 %220
    %v222 = vsel %vm68, %v216, 0.0
    %223 = vadd.xlane.f32.xlu0 %v222
    %v224 = vpop.xlane.xlu0 %223
    %v225 = vsel %vm68, %v217, 0.0
    %226 = vadd.xlane.f32.xlu0 %v225
    %v227 = vpop.xlane.xlu0 %226
    %v228 = vsel %vm68, %v218, 0.0
    %229 = vadd.xlane.f32.xlu0 %v228
    %v230 = vpop.xlane.xlu0 %229
    %v235 = vlaneseq
    %v236 = vand.u32 %v235, 127
    %v237 = vlaneseq
    %v238 = vshrl.u32 %v237, 7
    %v239 = vsub.s32 %v236, %v238
    %v240 = vrot.slane %v221, %v239
    %v241 = vadd.s32 %v236, 4294967288
    %v242 = vlaneseq
    %v243 = vshrl.u32 %v242, 7
    %v244 = vsub.s32 %v241, %v243
    %v245 = vrot.slane %v224, %v244
    %vm246 = vcmask 130112
    %v247 = vsel %vm246, %v245, %v240
    %v248 = vlaneseq
    %v249 = vshrl.u32 %v248, 7
    %v250 = vsub.s32 %v236, %v249
    %v251 = vrot.slane %v227, %v250
    %v252 = vlaneseq
    %v253 = vshrl.u32 %v252, 7
    %v254 = vsub.s32 %v241, %v253
    %v255 = vrot.slane %v230, %v254
    %v256 = vsel %vm246, %v255, %v251
    %vm257 = vcmask 1041409
    %v258 = vsel %vm257, %v256, %v247
    %vm260 = vcmask 123904
    %v261 = vsel %vm260, %v258, -inf
    %262 = vmax.xlane.f32.xlu0 %v261
    %v263 = vpop.xlane.xlu0 %262
    %v265 = vlaneseq
    %v266 = vshrl.u32 %v265, 7
    %v267 = vsub.s32 0, %v266
    %v268 = vrot.slane %v263, %v267
    %v269 = vlaneseq
    %v270 = vshrl.u32 %v269, 7
    %v271 = vsub.s32 1, %v270
    %v272 = vrot.slane %v263, %v271
    %v275 = vsub.f32 %v221, %v268
    %v276 = vsub.f32 %v224, %v268
    %v277 = vsub.f32 %v227, %v272
    %v278 = vsub.f32 %v230, %v272
    %v279 = vmul.f32 %v275, 1.442695
    %v280 = vpow.pop %v279
    %v281 = vmul.f32 %v276, 1.442695
    %v282 = vpow.pop %v281
    %v283 = vmul.f32 %v277, 1.442695
    %v284 = vpow.pop %v283
    %v285 = vmul.f32 %v278, 1.442695
    %v286 = vpow.pop %v285
    %291 = vset.pattern.permute.xlu0 0
    %292 = vperm.xlu0 %291, %v280
    %v293 = vpop.permute.xlu0 %292
    %294 = vset.pattern.permute.xlu0 0
    %295 = vperm.xlu0 %294, %v282
    %v296 = vpop.permute.xlu0 %295
    %297 = vset.pattern.permute.xlu0 0
    %298 = vperm.xlu0 %297, %v284
    %v299 = vpop.permute.xlu0 %298
    %300 = vset.pattern.permute.xlu0 0
    %301 = vperm.xlu0 %300, %v286
    %v302 = vpop.permute.xlu0 %301
    %v303 = vlaneseq
    %v304 = vshrl.u32 %v303, 7
    %v305 = vsub.s32 %v236, %v304
    %v306 = vrot.slane %v293, %v305
    %v307 = vlaneseq
    %v308 = vshrl.u32 %v307, 7
    %v309 = vsub.s32 %v241, %v308
    %v310 = vrot.slane %v296, %v309
    %v311 = vsel %vm246, %v310, %v306
    %v312 = vlaneseq
    %v313 = vshrl.u32 %v312, 7
    %v314 = vsub.s32 %v236, %v313
    %v315 = vrot.slane %v299, %v314
    %v316 = vlaneseq
    %v317 = vshrl.u32 %v316, 7
    %v318 = vsub.s32 %v241, %v317
    %v319 = vrot.slane %v302, %v318
    %v320 = vsel %vm246, %v319, %v315
    %v321 = vsel %vm257, %v320, %v311
    %v323 = vsel %vm260, %v321, 0.0
    %324 = vadd.xlane.f32.xlu0 %v323
    %v325 = vpop.xlane.xlu0 %324
    %v326 = vrcp.pop %v325
    %v328 = vlaneseq
    %v329 = vshrl.u32 %v328, 7
    %v330 = vsub.s32 0, %v329
    %v331 = vrot.slane %v326, %v330
    %v332 = vlaneseq
    %v333 = vshrl.u32 %v332, 7
    %v334 = vsub.s32 1, %v333
    %v335 = vrot.slane %v326, %v334
    %v338 = vmul.f32 %v280, %v331
    %v339 = vmul.f32 %v282, %v331
    %v340 = vmul.f32 %v284, %v335
    %v341 = vmul.f32 %v286, %v335
    %346 = vset.pattern.permute.xlu0 0
    %347 = vperm.xlu0 %346, %v338
    %v348 = vpop.permute.xlu0 %347
    %349 = vset.pattern.permute.xlu0 0
    %350 = vperm.xlu0 %349, %v339
    %v351 = vpop.permute.xlu0 %350
    %352 = vset.pattern.permute.xlu0 0
    %353 = vperm.xlu0 %352, %v340
    %v354 = vpop.permute.xlu0 %353
    %355 = vset.pattern.permute.xlu0 0
    %356 = vperm.xlu0 %355, %v341
    %v357 = vpop.permute.xlu0 %356
    %v358 = vlaneseq
    %v359 = vshrl.u32 %v358, 7
    %v360 = vsub.s32 %v236, %v359
    %v361 = vrot.slane %v348, %v360
    %v362 = vlaneseq
    %v363 = vshrl.u32 %v362, 7
    %v364 = vsub.s32 %v241, %v363
    %v365 = vrot.slane %v351, %v364
    %v366 = vsel %vm246, %v365, %v361
    %v367 = vlaneseq
    %v368 = vshrl.u32 %v367, 7
    %v369 = vsub.s32 %v236, %v368
    %v370 = vrot.slane %v354, %v369
    %v371 = vlaneseq
    %v372 = vshrl.u32 %v371, 7
    %v373 = vsub.s32 %v241, %v372
    %v374 = vrot.slane %v357, %v373
    %v375 = vsel %vm246, %v374, %v370
    %v376 = vsel %vm257, %v375, %v366
    %378 = vst.msk [vmem:[#allocation9] sm:$0x3] %vm260, %v376
    %v379 = vld [vmem:[#allocation2] sm:$0xff]
    %v380 = vld [vmem:[#allocation2 + $0x10] sm:$0xff]
    %v383 = vmul.f32 %v348, %v379
    %v384 = vmul.f32 %v354, %v380
    %v385 = vsel %vm68, %v383, 0.0
    %v386 = vrot.slane %v385, 4
    %v387 = vadd.f32 %v385, %v386
    %v388 = vrot.slane %v387, 2
    %v389 = vadd.f32 %v387, %v388
    %v390 = vrot.slane %v389, 1
    %v391 = vadd.f32 %v389, %v390
    %v392 = vsel %vm68, %v384, 0.0
    %v393 = vrot.slane %v392, 4
    %v394 = vadd.f32 %v392, %v393
    %v395 = vrot.slane %v394, 2
    %v396 = vadd.f32 %v394, %v395
    %v397 = vrot.slane %v396, 1
    %v398 = vadd.f32 %v396, %v397
    %v399 = vadd.f32 %v391, 0.0
    %v400 = vadd.f32 %v398, 0.0
    %v401 = vld [vmem:[#allocation2 + $0x8] sm:$0xff]
    %v402 = vld [vmem:[#allocation2 + $0x18] sm:$0xff]
    %v405 = vmul.f32 %v351, %v401
    %v406 = vmul.f32 %v357, %v402
    %v407 = vsel %vm68, %v405, 0.0
    %v408 = vrot.slane %v407, 4
    %v409 = vadd.f32 %v407, %v408
    %v410 = vrot.slane %v409, 2
    %v411 = vadd.f32 %v409, %v410
    %v412 = vrot.slane %v411, 1
    %v413 = vadd.f32 %v411, %v412
    %v414 = vsel %vm68, %v406, 0.0
    %v415 = vrot.slane %v414, 4
    %v416 = vadd.f32 %v414, %v415
    %v417 = vrot.slane %v416, 2
    %v418 = vadd.f32 %v416, %v417
    %v419 = vrot.slane %v418, 1
    %v420 = vadd.f32 %v418, %v419
    %v421 = vadd.f32 %v399, %v413
    %v422 = vadd.f32 %v400, %v420
    %v425 = vsel %vm257, %v422, %v421
    %vm427 = vcmask 254976
    %428 = vst.msk [vmem:[#allocation8] sm:$0x3] %vm427, %v425
    // Predicated region
    $region30: #{tpu_custom_call.1} parent=1 // pred_check
      _
    $region31: #{tpu_custom_call.1} parent=1 // pred_check_branch
      %430 = sbr.rel (0) target = $region33
    $region32: #{tpu_custom_call.1} parent=1 // pred_region
      %s432 = ssub.s32 32, 32
      %433 = vsyncadd [#allocation4], %s432
      %s435 = sshll.u32 [#allocation8], 4
      %s436 = int_to_ptr.vmem [resolvable:$true] %s435
      %438 = dma.vmem_to_hbm [thread:$0]  %s436, 32, %s4, [#allocation4]
    $region33: #{tpu_custom_call.1} parent=1 // pred_fallthru
      _
    // Predicated region
    $region34: #{tpu_custom_call.1} parent=1 // pred_check
      _
    $region35: #{tpu_custom_call.1} parent=1 // pred_check_branch
      %440 = sbr.rel (0) target = $region37
    $region36: #{tpu_custom_call.1} parent=1 // pred_region
      %s442 = ssub.s32 32, 32
      %443 = vsyncadd [#allocation10], %s442
      %s445 = sshll.u32 [#allocation9], 4
      %s446 = int_to_ptr.vmem [resolvable:$true] %s445
      %448 = dma.vmem_to_hbm [thread:$0]  %s446, 32, %s5, [#allocation10]
    $region37: #{tpu_custom_call.1} parent=1 // pred_fallthru
      _
    // Predicated region
    $region38: #{tpu_custom_call.1} parent=1 // pred_check
      _
    $region39: #{tpu_custom_call.1} parent=1 // pred_check_branch
      %450 = sbr.rel (0) target = $region41
    $region40: #{tpu_custom_call.1} parent=1 // pred_region
      %451 = dma.done [#allocation4], 32
    $region41: #{tpu_custom_call.1} parent=1 // pred_fallthru
      _
    // Predicated region
    $region42: #{tpu_custom_call.1} parent=1 // pred_check
      _
    $region43: #{tpu_custom_call.1} parent=1 // pred_check_branch
      %453 = sbr.rel (0) target = $region45
    $region44: #{tpu_custom_call.1} parent=1 // pred_region
      %454 = dma.done [#allocation10], 32
    $region45: #{tpu_custom_call.1} parent=1 // pred_fallthru
      _
    %455 = vsyncpa [#allocation3], 1
    %456 = vsyncpa [#allocation6], 1
    %457 = vsyncpa [#allocation4], 1
    %458 = vsyncpa [#allocation10], 1

</llo_original>
